<compile_context>
chip_gen: v5e
topology: v5e:2x2
jax: 0.10.0
libtpu: 0.0.40
codegen_flags: <defaults>
</compile_context>

<pallas_src>
import functools

import jax
import jax.numpy as jnp
from jax.experimental import pallas as pl
from jax.experimental.pallas import tpu as pltpu


def _hmt_fer_loss_kernel(logits_ref, labels_ref, out_ref, *,
                         n_rows, tile_n, need_mask, offs, widths, weights):
    """One batch tile: weighted sum of per-sample CE over all four heads.

    logits_ref: (C_total, TN) native dtype -- heads stacked on the sublane axis
    labels_ref: (4, TN) int32              -- one row per head
    out_ref:    (8, 128) f32               -- this tile's partial sum at [0, 0]
    """
    i = pl.program_id(0)
    x = logits_ref[...].astype(jnp.float32)     # cast in-register (VPU)
    labels = labels_ref[...]
    c_total, _ = x.shape

    # Sublane (class-row) index, shared by every head.
    row = jax.lax.broadcasted_iota(jnp.int32, (c_total, tile_n), 0)

    # --- per-head max (masked sublane reductions over <= 3 vregs) -----------
    sels, m_heads = [], []
    for h in range(4):
        sel = (row >= offs[h]) & (row < offs[h] + widths[h])
        sels.append(sel)
        m_heads.append(
            jnp.max(jnp.where(sel, x, -jnp.inf), axis=0, keepdims=True))

    # Scatter each head's max back onto its rows -> one shared exp pass.
    mvec = jnp.where(sels[0], m_heads[0], 0.0)
    for h in range(1, 4):
        mvec = jnp.where(sels[h], m_heads[h], mvec)
    e = jnp.exp(x - mvec)                       # (C_total, TN), single EUP pass

    # --- weighted logsumexp term --------------------------------------------
    loss_cols = jnp.zeros((1, tile_n), jnp.float32)
    for h in range(4):
        s_h = jnp.sum(jnp.where(sels[h], e, 0.0), axis=0, keepdims=True)
        loss_cols = loss_cols + weights[h] * (m_heads[h] + jnp.log(s_h))

    # --- weighted picked-logit term (one shared sublane reduction) ----------
    pickmat = jnp.zeros_like(x)
    for h in range(4):
        tgt = labels[h:h + 1, :] + offs[h]      # (1, TN) target class row
        pickmat = jnp.where(row == tgt, jnp.float32(weights[h]), pickmat)
    loss_cols = loss_cols - jnp.sum(pickmat * x, axis=0, keepdims=True)

    # --- mask the ragged last tile (select, NOT multiply) -------------------
    if need_mask:  # static flag: only emitted when N % TN != 0
        col = jax.lax.broadcasted_iota(jnp.int32, (1, tile_n), 1) + i * tile_n
        loss_cols = jnp.where(col < n_rows, loss_cols, 0.0)

    # --- this tile's partial sum, written to its own (8, 128) output block --
    partial = jnp.sum(loss_cols)
    r = jax.lax.broadcasted_iota(jnp.int32, (8, 128), 0)
    c = jax.lax.broadcasted_iota(jnp.int32, (8, 128), 1)
    out_ref[...] = jnp.where((r == 0) & (c == 0), partial, 0.0)


def hmt_fer_loss_packed(logits, labels, class_sizes, *,
                        weights=(0.1, 0.1, 0.1, 0.7), tile_n=4096):
    """Packed / lane-dense entry point.

    logits: (sum(class_sizes), N) -- heads concatenated along the class axis,
            in the same order as `class_sizes` / `weights`.
    labels: (len(class_sizes), N) int32, one row per head.
    Ideally the producing model emits this layout directly so the packing
    costs no extra HBM pass at all.
    """
    c_total, n = logits.shape
    num_heads = len(class_sizes)
    assert num_heads == 4, "kernel is specialized to the 4 HMTFER heads"
    assert c_total == int(sum(class_sizes))
    assert labels.shape == (num_heads, n)

    offs = tuple(int(sum(class_sizes[:h])) for h in range(num_heads))
    widths = tuple(int(c) for c in class_sizes)

    if tile_n is None:
        tile_n = 4096
    if n <= tile_n:
        tile_n = n                                        # single full block
    else:
        tile_n = max(128, (int(tile_n) // 128) * 128)     # lane-aligned tiles
    num_tiles = -(-n // tile_n)
    need_mask = (num_tiles * tile_n != n)

    kernel = functools.partial(
        _hmt_fer_loss_kernel,
        n_rows=n, tile_n=tile_n, need_mask=need_mask,
        offs=offs, widths=widths,
        weights=tuple(float(w) for w in weights))

    partials = pl.pallas_call(
        kernel,
        grid=(num_tiles,),
        in_specs=[pl.BlockSpec((c_total, tile_n), lambda i: (0, i)),
                  pl.BlockSpec((num_heads, tile_n), lambda i: (0, i))],
        out_specs=pl.BlockSpec((8, 128), lambda i: (i, 0)),
        out_shape=jax.ShapeDtypeStruct((num_tiles * 8, 128), jnp.float32),
        compiler_params=pltpu.CompilerParams(
            # Independent per-tile partials -> megacore-shardable on v7x.
            dimension_semantics=("parallel",)),
    )(logits, labels)

    return jnp.sum(partials) * (1.0 / n)


def hmt_fer_loss(gender_pred, gender_gt, race_pred, race_gt,
                 age_pred, age_gt, emotion_pred, emotion_gt,
                 *, emotion_branch_w=0.7, age_branch_w=0.1,
                 race_branch_w=0.1, gender_branch_w=0.1, tile_n=4096):
    """HMTFERLoss.forward with the original (per-head) calling convention.

    Packs the heads into the lane-dense layout expected by the kernel.  The
    repack is one small fused XLA pass; if the producing model can emit the
    packed (C_total, N)/(4, N) layout directly, call `hmt_fer_loss_packed`
    and skip it entirely.
    """
    preds = (gender_pred, race_pred, age_pred, emotion_pred)
    gts = (gender_gt, race_gt, age_gt, emotion_gt)
    weights = (gender_branch_w, race_branch_w, age_branch_w, emotion_branch_w)
    class_sizes = tuple(int(p.shape[1]) for p in preds)

    logits = jnp.concatenate([p.T for p in preds], axis=0)          # (C_tot,N)
    labels = jnp.stack([g.astype(jnp.int32) for g in gts], axis=0)  # (4, N)
    return hmt_fer_loss_packed(logits, labels, class_sizes,
                               weights=weights, tile_n=tile_n)


# ---------------- pure-JAX reference (for correctness check) ----------------
def _ce_ref(logits, labels):
    logits = logits.astype(jnp.float32)
    lse = jax.nn.logsumexp(logits, axis=-1)
    picked = jnp.take_along_axis(
        logits, labels[:, None].astype(jnp.int32), axis=-1)[:, 0]
    return jnp.mean(lse - picked)


def hmt_fer_loss_ref(gender_pred, gender_gt, race_pred, race_gt,
                     age_pred, age_gt, emotion_pred, emotion_gt,
                     emotion_branch_w=0.7, age_branch_w=0.1,
                     race_branch_w=0.1, gender_branch_w=0.1):
    gender_loss = _ce_ref(gender_pred, gender_gt)
    race_loss = _ce_ref(race_pred, race_gt)
    age_loss = _ce_ref(age_pred, age_gt)
    emotion_loss = _ce_ref(emotion_pred, emotion_gt)
    return (emotion_branch_w * emotion_loss + age_branch_w * age_loss
            + race_branch_w * race_loss + gender_branch_w * gender_loss)


if __name__ == "__main__":
    key = jax.random.PRNGKey(0)
    ks = jax.random.split(key, 8)

    # Small shapes; N chosen so that tile_n=128 gives a multi-tile grid with a
    # ragged last tile (exercises in-kernel masking + parallel partials).
    N = 300
    C_GENDER, C_RACE, C_AGE, C_EMOTION = 2, 4, 9, 7

    gender_pred = jax.random.normal(ks[0], (N, C_GENDER), dtype=jnp.float32)
    gender_gt = jax.random.randint(ks[1], (N,), 0, C_GENDER, dtype=jnp.int32)
    race_pred = jax.random.normal(ks[2], (N, C_RACE), dtype=jnp.float32)
    race_gt = jax.random.randint(ks[3], (N,), 0, C_RACE, dtype=jnp.int32)
    age_pred = jax.random.normal(ks[4], (N, C_AGE), dtype=jnp.float32)
    age_gt = jax.random.randint(ks[5], (N,), 0, C_AGE, dtype=jnp.int32)
    emotion_pred = jax.random.normal(ks[6], (N, C_EMOTION), dtype=jnp.float32)
    emotion_gt = jax.random.randint(ks[7], (N,), 0, C_EMOTION, dtype=jnp.int32)

    ref = hmt_fer_loss_ref(gender_pred, gender_gt, race_pred, race_gt,
                           age_pred, age_gt, emotion_pred, emotion_gt)

    # Multi-tile path (grid = 3, ragged last tile of 44 samples).
    out_tiled = hmt_fer_loss(gender_pred, gender_gt, race_pred, race_gt,
                             age_pred, age_gt, emotion_pred, emotion_gt,
                             tile_n=128)
    out_tiled = jax.block_until_ready(out_tiled)
    assert jnp.allclose(out_tiled, ref, rtol=1e-5, atol=1e-5), (out_tiled, ref)

    # Default single-block path (tile covers the full batch).
    out_full = hmt_fer_loss(gender_pred, gender_gt, race_pred, race_gt,
                            age_pred, age_gt, emotion_pred, emotion_gt)
    out_full = jax.block_until_ready(out_full)
    assert jnp.allclose(out_full, ref, rtol=1e-5, atol=1e-5), (out_full, ref)

    # TODO(synk): nn.CrossEntropyLoss extras (ignore_index, class weights,
    # label smoothing) are not modeled; the module uses the defaults.
    print("KERNEL_OK")
</pallas_src>

<mosaic_0001>
module attributes {stable_mosaic.version = 11 : i64} {
  func.func @_hmt_fer_loss_kernel(%arg0: i32, %arg1: memref<22x128xf32, #tpu.memory_space<vmem>>, %arg2: memref<4x128xi32, #tpu.memory_space<vmem>>, %arg3: memref<8x128xf32, #tpu.memory_space<vmem>>) attributes {dimension_semantics = [#tpu.dimension_semantics<parallel>], iteration_bounds = array<i64: 3>, scalar_prefetch = 0 : i64, scratch_operands = 0 : i64, tpu.core_type = #tpu.core_type<tc>, window_params = [{transform_indices = @transform_0, window_bounds = array<i64: 22, 128>}, {transform_indices = @transform_1, window_bounds = array<i64: 4, 128>}, {transform_indices = @transform_2, window_bounds = array<i64: 8, 128>}]} {
    %c0 = arith.constant 0 : index
    %c0_0 = arith.constant 0 : index
    %0 = vector.load %arg1[%c0, %c0_0] : memref<22x128xf32, #tpu.memory_space<vmem>>, vector<22x128xf32>
    %c0_1 = arith.constant 0 : index
    %c0_2 = arith.constant 0 : index
    %1 = vector.load %arg2[%c0_1, %c0_2] : memref<4x128xi32, #tpu.memory_space<vmem>>, vector<4x128xi32>
    %2 = tpu.iota {dimensions = array<i32: 0>} : vector<22x128xi32>
    %c0_i32 = arith.constant 0 : i32
    %3 = vector.broadcast %c0_i32 : i32 to vector<22x128xi32>
    %4 = arith.cmpi sge, %2, %3 : vector<22x128xi32>
    %c2_i32 = arith.constant 2 : i32
    %5 = vector.broadcast %c2_i32 : i32 to vector<22x128xi32>
    %6 = arith.cmpi slt, %2, %5 : vector<22x128xi32>
    %7 = arith.andi %4, %6 : vector<22x128xi1>
    %cst = arith.constant 0xFF800000 : f32
    %8 = vector.broadcast %cst : f32 to vector<22x128xf32>
    %9 = arith.select %7, %0, %8 : vector<22x128xi1>, vector<22x128xf32>
    %cst_3 = arith.constant dense<0xFF800000> : vector<128xf32>
    %10 = vector.multi_reduction <maximumf>, %9, %cst_3 [0] : vector<22x128xf32> to vector<128xf32>
    %11 = vector.shape_cast %10 : vector<128xf32> to vector<1x128xf32>
    %c2_i32_4 = arith.constant 2 : i32
    %12 = vector.broadcast %c2_i32_4 : i32 to vector<22x128xi32>
    %13 = arith.cmpi sge, %2, %12 : vector<22x128xi32>
    %c6_i32 = arith.constant 6 : i32
    %14 = vector.broadcast %c6_i32 : i32 to vector<22x128xi32>
    %15 = arith.cmpi slt, %2, %14 : vector<22x128xi32>
    %16 = arith.andi %13, %15 : vector<22x128xi1>
    %cst_5 = arith.constant 0xFF800000 : f32
    %17 = vector.broadcast %cst_5 : f32 to vector<22x128xf32>
    %18 = arith.select %16, %0, %17 : vector<22x128xi1>, vector<22x128xf32>
    %cst_6 = arith.constant dense<0xFF800000> : vector<128xf32>
    %19 = vector.multi_reduction <maximumf>, %18, %cst_6 [0] : vector<22x128xf32> to vector<128xf32>
    %20 = vector.shape_cast %19 : vector<128xf32> to vector<1x128xf32>
    %c6_i32_7 = arith.constant 6 : i32
    %21 = vector.broadcast %c6_i32_7 : i32 to vector<22x128xi32>
    %22 = arith.cmpi sge, %2, %21 : vector<22x128xi32>
    %c15_i32 = arith.constant 15 : i32
    %23 = vector.broadcast %c15_i32 : i32 to vector<22x128xi32>
    %24 = arith.cmpi slt, %2, %23 : vector<22x128xi32>
    %25 = arith.andi %22, %24 : vector<22x128xi1>
    %cst_8 = arith.constant 0xFF800000 : f32
    %26 = vector.broadcast %cst_8 : f32 to vector<22x128xf32>
    %27 = arith.select %25, %0, %26 : vector<22x128xi1>, vector<22x128xf32>
    %cst_9 = arith.constant dense<0xFF800000> : vector<128xf32>
    %28 = vector.multi_reduction <maximumf>, %27, %cst_9 [0] : vector<22x128xf32> to vector<128xf32>
    %29 = vector.shape_cast %28 : vector<128xf32> to vector<1x128xf32>
    %c15_i32_10 = arith.constant 15 : i32
    %30 = vector.broadcast %c15_i32_10 : i32 to vector<22x128xi32>
    %31 = arith.cmpi sge, %2, %30 : vector<22x128xi32>
    %c22_i32 = arith.constant 22 : i32
    %32 = vector.broadcast %c22_i32 : i32 to vector<22x128xi32>
    %33 = arith.cmpi slt, %2, %32 : vector<22x128xi32>
    %34 = arith.andi %31, %33 : vector<22x128xi1>
    %cst_11 = arith.constant 0xFF800000 : f32
    %35 = vector.broadcast %cst_11 : f32 to vector<22x128xf32>
    %36 = arith.select %34, %0, %35 : vector<22x128xi1>, vector<22x128xf32>
    %cst_12 = arith.constant dense<0xFF800000> : vector<128xf32>
    %37 = vector.multi_reduction <maximumf>, %36, %cst_12 [0] : vector<22x128xf32> to vector<128xf32>
    %38 = vector.shape_cast %37 : vector<128xf32> to vector<1x128xf32>
    %cst_13 = arith.constant 0.000000e+00 : f32
    %39 = vector.shape_cast %11 : vector<1x128xf32> to vector<1x128xf32>
    %40 = vector.broadcast %39 : vector<1x128xf32> to vector<22x128xf32>
    %41 = vector.broadcast %cst_13 : f32 to vector<22x128xf32>
    %42 = arith.select %7, %40, %41 : vector<22x128xi1>, vector<22x128xf32>
    %43 = vector.shape_cast %20 : vector<1x128xf32> to vector<1x128xf32>
    %44 = vector.broadcast %43 : vector<1x128xf32> to vector<22x128xf32>
    %45 = arith.select %16, %44, %42 : vector<22x128xi1>, vector<22x128xf32>
    %46 = vector.shape_cast %29 : vector<1x128xf32> to vector<1x128xf32>
    %47 = vector.broadcast %46 : vector<1x128xf32> to vector<22x128xf32>
    %48 = arith.select %25, %47, %45 : vector<22x128xi1>, vector<22x128xf32>
    %49 = vector.shape_cast %38 : vector<1x128xf32> to vector<1x128xf32>
    %50 = vector.broadcast %49 : vector<1x128xf32> to vector<22x128xf32>
    %51 = arith.select %34, %50, %48 : vector<22x128xi1>, vector<22x128xf32>
    %52 = arith.subf %0, %51 : vector<22x128xf32>
    %53 = math.exp %52 : vector<22x128xf32>
    %cst_14 = arith.constant 0.000000e+00 : f32
    %54 = vector.broadcast %cst_14 : f32 to vector<1x128xf32>
    %cst_15 = arith.constant 0.000000e+00 : f32
    %55 = vector.broadcast %cst_15 : f32 to vector<22x128xf32>
    %56 = arith.select %7, %53, %55 : vector<22x128xi1>, vector<22x128xf32>
    %cst_16 = arith.constant dense<0.000000e+00> : vector<128xf32>
    %57 = vector.multi_reduction <add>, %56, %cst_16 [0] : vector<22x128xf32> to vector<128xf32>
    %58 = vector.shape_cast %57 : vector<128xf32> to vector<1x128xf32>
    %59 = math.log %58 : vector<1x128xf32>
    %60 = arith.addf %11, %59 : vector<1x128xf32>
    %cst_17 = arith.constant 1.000000e-01 : f32
    %61 = vector.broadcast %cst_17 : f32 to vector<1x128xf32>
    %62 = arith.mulf %61, %60 : vector<1x128xf32>
    %63 = arith.addf %54, %62 : vector<1x128xf32>
    %cst_18 = arith.constant 0.000000e+00 : f32
    %64 = vector.broadcast %cst_18 : f32 to vector<22x128xf32>
    %65 = arith.select %16, %53, %64 : vector<22x128xi1>, vector<22x128xf32>
    %cst_19 = arith.constant dense<0.000000e+00> : vector<128xf32>
    %66 = vector.multi_reduction <add>, %65, %cst_19 [0] : vector<22x128xf32> to vector<128xf32>
    %67 = vector.shape_cast %66 : vector<128xf32> to vector<1x128xf32>
    %68 = math.log %67 : vector<1x128xf32>
    %69 = arith.addf %20, %68 : vector<1x128xf32>
    %cst_20 = arith.constant 1.000000e-01 : f32
    %70 = vector.broadcast %cst_20 : f32 to vector<1x128xf32>
    %71 = arith.mulf %70, %69 : vector<1x128xf32>
    %72 = arith.addf %63, %71 : vector<1x128xf32>
    %cst_21 = arith.constant 0.000000e+00 : f32
    %73 = vector.broadcast %cst_21 : f32 to vector<22x128xf32>
    %74 = arith.select %25, %53, %73 : vector<22x128xi1>, vector<22x128xf32>
    %cst_22 = arith.constant dense<0.000000e+00> : vector<128xf32>
    %75 = vector.multi_reduction <add>, %74, %cst_22 [0] : vector<22x128xf32> to vector<128xf32>
    %76 = vector.shape_cast %75 : vector<128xf32> to vector<1x128xf32>
    %77 = math.log %76 : vector<1x128xf32>
    %78 = arith.addf %29, %77 : vector<1x128xf32>
    %cst_23 = arith.constant 1.000000e-01 : f32
    %79 = vector.broadcast %cst_23 : f32 to vector<1x128xf32>
    %80 = arith.mulf %79, %78 : vector<1x128xf32>
    %81 = arith.addf %72, %80 : vector<1x128xf32>
    %cst_24 = arith.constant 0.000000e+00 : f32
    %82 = vector.broadcast %cst_24 : f32 to vector<22x128xf32>
    %83 = arith.select %34, %53, %82 : vector<22x128xi1>, vector<22x128xf32>
    %cst_25 = arith.constant dense<0.000000e+00> : vector<128xf32>
    %84 = vector.multi_reduction <add>, %83, %cst_25 [0] : vector<22x128xf32> to vector<128xf32>
    %85 = vector.shape_cast %84 : vector<128xf32> to vector<1x128xf32>
    %86 = math.log %85 : vector<1x128xf32>
    %87 = arith.addf %38, %86 : vector<1x128xf32>
    %cst_26 = arith.constant 0.699999988 : f32
    %88 = vector.broadcast %cst_26 : f32 to vector<1x128xf32>
    %89 = arith.mulf %88, %87 : vector<1x128xf32>
    %90 = arith.addf %81, %89 : vector<1x128xf32>
    %cst_27 = arith.constant 0.000000e+00 : f32
    %91 = vector.broadcast %cst_27 : f32 to vector<22x128xf32>
    %92 = vector.extract_strided_slice %1 {offsets = [0, 0], sizes = [1, 128], strides = [1, 1]} : vector<4x128xi32> to vector<1x128xi32>
    %c0_i32_28 = arith.constant 0 : i32
    %93 = vector.broadcast %c0_i32_28 : i32 to vector<1x128xi32>
    %94 = arith.addi %92, %93 : vector<1x128xi32>
    %95 = vector.broadcast %94 : vector<1x128xi32> to vector<22x128xi32>
    %96 = arith.cmpi eq, %2, %95 : vector<22x128xi32>
    %cst_29 = arith.constant 1.000000e-01 : f32
    %97 = vector.broadcast %cst_29 : f32 to vector<22x128xf32>
    %98 = arith.select %96, %97, %91 : vector<22x128xi1>, vector<22x128xf32>
    %99 = vector.extract_strided_slice %1 {offsets = [1, 0], sizes = [1, 128], strides = [1, 1]} : vector<4x128xi32> to vector<1x128xi32>
    %c2_i32_30 = arith.constant 2 : i32
    %100 = vector.broadcast %c2_i32_30 : i32 to vector<1x128xi32>
    %101 = arith.addi %99, %100 : vector<1x128xi32>
    %102 = vector.broadcast %101 : vector<1x128xi32> to vector<22x128xi32>
    %103 = arith.cmpi eq, %2, %102 : vector<22x128xi32>
    %cst_31 = arith.constant 1.000000e-01 : f32
    %104 = vector.broadcast %cst_31 : f32 to vector<22x128xf32>
    %105 = arith.select %103, %104, %98 : vector<22x128xi1>, vector<22x128xf32>
    %106 = vector.extract_strided_slice %1 {offsets = [2, 0], sizes = [1, 128], strides = [1, 1]} : vector<4x128xi32> to vector<1x128xi32>
    %c6_i32_32 = arith.constant 6 : i32
    %107 = vector.broadcast %c6_i32_32 : i32 to vector<1x128xi32>
    %108 = arith.addi %106, %107 : vector<1x128xi32>
    %109 = vector.broadcast %108 : vector<1x128xi32> to vector<22x128xi32>
    %110 = arith.cmpi eq, %2, %109 : vector<22x128xi32>
    %cst_33 = arith.constant 1.000000e-01 : f32
    %111 = vector.broadcast %cst_33 : f32 to vector<22x128xf32>
    %112 = arith.select %110, %111, %105 : vector<22x128xi1>, vector<22x128xf32>
    %113 = vector.extract_strided_slice %1 {offsets = [3, 0], sizes = [1, 128], strides = [1, 1]} : vector<4x128xi32> to vector<1x128xi32>
    %c15_i32_34 = arith.constant 15 : i32
    %114 = vector.broadcast %c15_i32_34 : i32 to vector<1x128xi32>
    %115 = arith.addi %113, %114 : vector<1x128xi32>
    %116 = vector.broadcast %115 : vector<1x128xi32> to vector<22x128xi32>
    %117 = arith.cmpi eq, %2, %116 : vector<22x128xi32>
    %cst_35 = arith.constant 0.699999988 : f32
    %118 = vector.broadcast %cst_35 : f32 to vector<22x128xf32>
    %119 = arith.select %117, %118, %112 : vector<22x128xi1>, vector<22x128xf32>
    %120 = arith.mulf %119, %0 : vector<22x128xf32>
    %cst_36 = arith.constant dense<0.000000e+00> : vector<128xf32>
    %121 = vector.multi_reduction <add>, %120, %cst_36 [0] : vector<22x128xf32> to vector<128xf32>
    %122 = vector.shape_cast %121 : vector<128xf32> to vector<1x128xf32>
    %123 = arith.subf %90, %122 : vector<1x128xf32>
    %124 = tpu.iota {dimensions = array<i32: 1>} : vector<1x128xi32>
    %c128_i32 = arith.constant 128 : i32
    %125 = arith.muli %arg0, %c128_i32 : i32
    %126 = vector.broadcast %125 : i32 to vector<1x128xi32>
    %127 = arith.addi %124, %126 : vector<1x128xi32>
    %c300_i32 = arith.constant 300 : i32
    %128 = vector.broadcast %c300_i32 : i32 to vector<1x128xi32>
    %129 = arith.cmpi slt, %127, %128 : vector<1x128xi32>
    %cst_37 = arith.constant 0.000000e+00 : f32
    %130 = vector.broadcast %cst_37 : f32 to vector<1x128xf32>
    %131 = arith.select %129, %123, %130 : vector<1x128xi1>, vector<1x128xf32>
    %132 = vector.shape_cast %131 : vector<1x128xf32> to vector<1x1x128xf32>
    %cst_38 = arith.constant dense<0.000000e+00> : vector<1xf32>
    %133 = vector.multi_reduction <add>, %132, %cst_38 [1, 2] : vector<1x1x128xf32> to vector<1xf32>
    %134 = vector.shape_cast %133 : vector<1xf32> to vector<1x1x1xf32>
    %135 = vector.extract %134[0, 0, 0] : f32 from vector<1x1x1xf32>
    %136 = tpu.iota {dimensions = array<i32: 0>} : vector<8x128xi32>
    %137 = tpu.iota {dimensions = array<i32: 1>} : vector<8x128xi32>
    %c0_i32_39 = arith.constant 0 : i32
    %138 = vector.broadcast %c0_i32_39 : i32 to vector<8x128xi32>
    %139 = arith.cmpi eq, %136, %138 : vector<8x128xi32>
    %c0_i32_40 = arith.constant 0 : i32
    %140 = vector.broadcast %c0_i32_40 : i32 to vector<8x128xi32>
    %141 = arith.cmpi eq, %137, %140 : vector<8x128xi32>
    %142 = arith.andi %139, %141 : vector<8x128xi1>
    %cst_41 = arith.constant 0.000000e+00 : f32
    %143 = vector.broadcast %135 : f32 to vector<8x128xf32>
    %144 = vector.broadcast %cst_41 : f32 to vector<8x128xf32>
    %145 = arith.select %142, %143, %144 : vector<8x128xi1>, vector<8x128xf32>
    %c0_42 = arith.constant 0 : index
    %c0_43 = arith.constant 0 : index
    %146 = vector.load %arg3[%c0_42, %c0_43] : memref<8x128xf32, #tpu.memory_space<vmem>>, vector<8x128xf32>
    tpu.vector_store %arg3[%c0_42, %c0_43], %145 {strides = array<i32>} : memref<8x128xf32, #tpu.memory_space<vmem>>, vector<8x128xf32>,
    return
  }
  func.func @transform_0(%arg0: i32) -> (i32, i32) {
    %c0_i32 = arith.constant 0 : i32
    %c0_i32_0 = arith.constant 0 : i32
    return %c0_i32, %arg0 : i32, i32
  }
  func.func @transform_1(%arg0: i32) -> (i32, i32) {
    %c0_i32 = arith.constant 0 : i32
    %c0_i32_0 = arith.constant 0 : i32
    return %c0_i32, %arg0 : i32, i32
  }
  func.func @transform_2(%arg0: i32) -> (i32, i32) {
    %c0_i32 = arith.constant 0 : i32
    %c0_i32_0 = arith.constant 0 : i32
    return %arg0, %c0_i32 : i32, i32
  }
}

</mosaic_0001>

<llo_original>
// kernel: tpu_custom_call.1
$region0: #{tpu_custom_call.1}
  #allocation0 [shape = 'u32[]', space=smem, size = 0x4, offset = 0x4, fixed_abs, tag = 'smem constant byte address 0x4 - core index']
  #allocation1 [shape = 'u32[72,128]{1,0:T(1,128)}', space=vmem, size = 0x9000, scoped, tag = 'internal scratch']
  %s0 = inlined_call_operand.hbm [shape: f32[22,300], index: 0, kind: input, shape index: {}]
  %s1 = inlined_call_operand.hbm [shape: s32[4,300], index: 1, kind: input, shape index: {}]
  %s2 = inlined_call_operand.hbm [shape: f32[24,128], index: 2, kind: output, shape index: {}]
  %s3 = sld [smem:[#allocation0]]
  $region49: #{tpu_custom_call.1} parent=0
    _
  %s5 = ssub.s32 1, %s3
  %s6 = scalar_select 0, %s5, %s3
  $region1: #{tpu_custom_call.1} parent=0
    #allocation2 [shape = 'u8[24576]{0}', space=vmem, size = 0x6000, scoped, tag = 'input window, operand 0']
    #allocation3 [shape = 's32[2]{0}', space=sflag, size = 0x8, scoped, tag = 'scoped memory for tpu_custom_call.1']
    #allocation4 [shape = 's32[2]{0}', space=sflag, size = 0x8, scoped, tag = 'scoped memory for tpu_custom_call.1']
    #allocation5 [shape = 'u8[4096]{0}', space=vmem, size = 0x1000, scoped, tag = 'input window, operand 1']
    #allocation6 [shape = 's32[2]{0}', space=sflag, size = 0x8, scoped, tag = 'scoped memory for tpu_custom_call.1']
    #allocation7 [shape = 'u8[8192]{0}', space=vmem, size = 0x2000, scoped, tag = 'output window, operand 0']
    %7 = vsyncpa [#allocation3], 0
    %s8 = scalar_lea.sflag [#allocation3], 1
    %9 = vsyncpa %s8, 0
    %10 = vsyncpa [#allocation6], 0
    %s11 = scalar_lea.sflag [#allocation6], 1
    %12 = vsyncpa %s11, 0
    %13 = vsyncpa [#allocation4], 0
    %s14 = scalar_lea.sflag [#allocation4], 1
    %15 = vsyncpa %s14, 0
    loop: start=0, step=1, limit=5
    $region2: #{tpu_custom_call.1} parent=1 // loop_pre_header
      _
    $region3: #{tpu_custom_call.1} parent=1 // loop_header
      %s17 = sphi 0, %s21
      %p18 = scmp.ge.s32.totalorder %s17, 5
      %s27 = sphi 0, %s29
      %s30 = sphi 0, %s27
      %s31 = sphi 0, %s30
      %s47 = sphi 0, %s31
      %s53 = sphi 0, %s55
      %s56 = sphi 0, %s53
      %s57 = sphi 0, %s56
      %s73 = sphi 0, %s57
      %s79 = sphi 0, %s81
      %s82 = sphi 0, %s79
      %s83 = sphi 0, %s82
      %s99 = sphi 0, %s83
    $region4: #{tpu_custom_call.1} parent=1 // loop_header_branch
      %20 = sbr.rel (%p18) target = $region8
    $region5: #{tpu_custom_call.1} parent=1 // loop_body
      %s22 = ssub.s32 %s17, 1
      %s23 = ssub.s32 %s17, 2
      %s24 = sadd.s32 %s17, 1
      %s25 = ssub.s32 %s17, %s24
      %p26 = scmp.eq.s32.totalorder %s25, 0
      %s28 = sadd.s32 %s27, 1
      %s29 = scalar_select %p26, %s27, %s28
      %p32 = pneg %p26
      %p33 = scmp.eq.s32.totalorder %s17, 2
      %p34 = por %p32, %p33
      %p35 = scmp.ne.s32.totalorder %s27, %s30
      %p36 = scmp.eq.s32.totalorder %s17, 0
      %p37 = por %p35, %p36
      %p38 = scmp.ne.s32.totalorder %s27, %s30
      %p39 = scmp.eq.s32.totalorder %s22, 2
      %p40 = por %p38, %p39
      %p41 = scmp.ne.s32.totalorder %s30, %s31
      %p42 = scmp.eq.s32.totalorder %s22, 0
      %p43 = por %p41, %p42
      %p44 = scmp.ne.s32.totalorder %s30, %s31
      %p45 = scmp.eq.s32.totalorder %s23, 2
      %p46 = por %p44, %p45
      %p48 = scmp.ne.s32.totalorder %s31, %s47
      %p49 = scmp.eq.s32.totalorder %s23, 0
      %p50 = por %p48, %p49
      %s51 = ssub.s32 %s17, %s24
      %p52 = scmp.eq.s32.totalorder %s51, 0
      %s54 = sadd.s32 %s53, 1
      %s55 = scalar_select %p52, %s53, %s54
      %p58 = pneg %p52
      %p59 = scmp.eq.s32.totalorder %s17, 2
      %p60 = por %p58, %p59
      %p61 = scmp.ne.s32.totalorder %s53, %s56
      %p62 = scmp.eq.s32.totalorder %s17, 0
      %p63 = por %p61, %p62
      %p64 = scmp.ne.s32.totalorder %s53, %s56
      %p65 = scmp.eq.s32.totalorder %s22, 2
      %p66 = por %p64, %p65
      %p67 = scmp.ne.s32.totalorder %s56, %s57
      %p68 = scmp.eq.s32.totalorder %s22, 0
      %p69 = por %p67, %p68
      %p70 = scmp.ne.s32.totalorder %s56, %s57
      %p71 = scmp.eq.s32.totalorder %s23, 2
      %p72 = por %p70, %p71
      %p74 = scmp.ne.s32.totalorder %s57, %s73
      %p75 = scmp.eq.s32.totalorder %s23, 0
      %p76 = por %p74, %p75
      %s77 = ssub.s32 %s17, %s24
      %p78 = scmp.eq.s32.totalorder %s77, 0
      %s80 = sadd.s32 %s79, 1
      %s81 = scalar_select %p78, %s79, %s80
      %p84 = pneg %p78
      %p85 = scmp.eq.s32.totalorder %s17, 2
      %p86 = por %p84, %p85
      %p87 = scmp.ne.s32.totalorder %s79, %s82
      %p88 = scmp.eq.s32.totalorder %s17, 0
      %p89 = por %p87, %p88
      %p90 = scmp.ne.s32.totalorder %s79, %s82
      %p91 = scmp.eq.s32.totalorder %s22, 2
      %p92 = por %p90, %p91
      %p93 = scmp.ne.s32.totalorder %s82, %s83
      %p94 = scmp.eq.s32.totalorder %s22, 0
      %p95 = por %p93, %p94
      %p96 = scmp.ne.s32.totalorder %s82, %s83
      %p97 = scmp.eq.s32.totalorder %s23, 2
      %p98 = por %p96, %p97
      %p100 = scmp.ne.s32.totalorder %s83, %s99
      %p101 = scmp.eq.s32.totalorder %s23, 0
      %p102 = por %p100, %p101
      %p103 = scmp.le.s32.totalorder 1, %s17
      %p104 = scmp.lt.s32.totalorder %s17, 4
      %p105 = pnand %p103, %p104
      %p106 = pneg %p105
      // Predicated region
      $region9: #{tpu_custom_call.1} parent=5 // pred_check
        _
      $region10: #{tpu_custom_call.1} parent=5 // pred_check_branch
        %108 = sbr.rel (%p105) target = $region12
      $region11: #{tpu_custom_call.1} parent=5 // pred_region
        %s109 = ssub.s32 %s17, 1
      $region12: #{tpu_custom_call.1} parent=5 // pred_fallthru
        _
      %p110 = scmp.lt.s32.totalorder %s17, 3
      // Predicated region
      $region13: #{tpu_custom_call.1} parent=5 // pred_check
        %p111 = pneg %p110
      $region14: #{tpu_custom_call.1} parent=5 // pred_check_branch
        %113 = sbr.rel (%p111) target = $region16
      $region15: #{tpu_custom_call.1} parent=5 // pred_region
        // Predicated region
        $region17: #{tpu_custom_call.1} parent=15 // pred_check
          %p114 = pneg %p37
        $region18: #{tpu_custom_call.1} parent=15 // pred_check_branch
          %116 = sbr.rel (%p114) target = $region20
        $region19: #{tpu_custom_call.1} parent=15 // pred_region
          %s117 = sand.u32 %s27, 1
          %s118 = scalar_lea.sflag [#allocation3], %s117
          %s119 = sand.u32 %s27, 1
          %s120 = smul.addr %s119, 24
          %s121 = scalar_lea.vmem [#allocation2], %s120
          %123 = vsyncadd %s118, 0
          %s124 = smul.addr %s17, 8
          %s125 = scalar_lea.hbm %s0, %s124
          %s126 = sshll.u32 %s125, 4
          %s127 = int_to_ptr.hbm [resolvable:$true] %s126
          %s128 = sshll.u32 %s121, 4
          %s129 = int_to_ptr.vmem [resolvable:$true] %s128
          %134 = dma.hbm_to_vmem [thread:$0]  %s127, 384, %s129, %s118, 384, 128, 8
        $region20: #{tpu_custom_call.1} parent=15 // pred_fallthru
          _
        // Predicated region
        $region21: #{tpu_custom_call.1} parent=15 // pred_check
          %p135 = pneg %p63
        $region22: #{tpu_custom_call.1} parent=15 // pred_check_branch
          %137 = sbr.rel (%p135) target = $region24
        $region23: #{tpu_custom_call.1} parent=15 // pred_region
          %s138 = sand.u32 %s53, 1
          %s139 = scalar_lea.sflag [#allocation6], %s138
          %s140 = sand.u32 %s53, 1
          %s141 = smul.addr %s140, 4
          %s142 = scalar_lea.vmem [#allocation5], %s141
          %144 = vsyncadd %s139, 0
          %s145 = smul.addr %s17, 4
          %s146 = scalar_lea.hbm %s1, %s145
          %s148 = sshll.u32 %s146, 4
          %s149 = int_to_ptr.hbm [resolvable:$true] %s148
          %s150 = sshll.u32 %s142, 4
          %s151 = int_to_ptr.vmem [resolvable:$true] %s150
          %153 = dma.hbm_to_vmem [thread:$0]  %s149, 64, %s151, %s139
        $region24: #{tpu_custom_call.1} parent=15 // pred_fallthru
          _
      $region16: #{tpu_custom_call.1} parent=5 // pred_fallthru
        _
      %p154 = scmp.le.s32.totalorder 1, %s17
      %p155 = scmp.lt.s32.totalorder %s17, 4
      %p156 = pnand %p154, %p155
      %p157 = pneg %p156
      // Predicated region
      $region25: #{tpu_custom_call.1} parent=5 // pred_check
        _
      $region26: #{tpu_custom_call.1} parent=5 // pred_check_branch
        %159 = sbr.rel (%p156) target = $region28
      $region27: #{tpu_custom_call.1} parent=5 // pred_region
        %s160 = ssub.s32 %s17, 1
        %s161 = sand.u32 %s30, 1
        %s162 = scalar_lea.sflag [#allocation3], %s161
        %s163 = sand.u32 %s30, 1
        %s164 = smul.addr %s163, 24
        %s165 = scalar_lea.vmem [#allocation2], %s164
        // Predicated region
        $region29: #{tpu_custom_call.1} parent=27 // pred_check
          %p166 = pneg %p43
        $region30: #{tpu_custom_call.1} parent=27 // pred_check_branch
          %168 = sbr.rel (%p166) target = $region32
        $region31: #{tpu_custom_call.1} parent=27 // pred_region
          %170 = dma.done %s162, 384
        $region32: #{tpu_custom_call.1} parent=27 // pred_fallthru
          _
        %s171 = sand.u32 %s56, 1
        %s172 = scalar_lea.sflag [#allocation6], %s171
        %s173 = sand.u32 %s56, 1
        %s174 = smul.addr %s173, 4
        %s175 = scalar_lea.vmem [#allocation5], %s174
        // Predicated region
        $region33: #{tpu_custom_call.1} parent=27 // pred_check
          %p176 = pneg %p69
        $region34: #{tpu_custom_call.1} parent=27 // pred_check_branch
          %178 = sbr.rel (%p176) target = $region36
        $region35: #{tpu_custom_call.1} parent=27 // pred_region
          %180 = dma.done %s172, 64
        $region36: #{tpu_custom_call.1} parent=27 // pred_fallthru
          _
        %s181 = sand.u32 %s30, 1
        %s182 = scalar_lea.sflag [#allocation3], %s181
        %s183 = sand.u32 %s30, 1
        %s184 = smul.addr %s183, 24
        %s185 = scalar_lea.vmem [#allocation2], %s184
        %p186 = pneg %p43
        %p187 = pneg %p40
        %s188 = sand.u32 %s56, 1
        %s189 = scalar_lea.sflag [#allocation6], %s188
        %s190 = sand.u32 %s56, 1
        %s191 = smul.addr %s190, 4
        %s192 = scalar_lea.vmem [#allocation5], %s191
        %p193 = pneg %p69
        %p194 = pneg %p66
        %p195 = pneg %p95
        %p196 = pneg %p92
        %s197 = sand.u32 %s82, 1
        %s198 = scalar_lea.sflag [#allocation4], %s197
        %s199 = sand.u32 %s82, 1
        %s200 = smul.addr %s199, 8
        %s201 = scalar_lea.vmem [#allocation7], %s200
        %v202 = vld [vmem:[%s165] sm:$0xff]
        %v203 = vld [vmem:[%s165 + $0x8] sm:$0xff]
        %v204 = vld [vmem:[%s165 + $0x10] sm:$0x3f]
        %v205 = vld [vmem:[%s175] sm:$0xf]
        %v206 = vlaneseq
        %v207 = vshrl.u32 %v206, 7
        %v208 = vadd.s32 %v207, 8
        %v209 = vadd.s32 %v207, 16
        %vm210 = vcmp.ge.s32.totalorder %v207, 0
        %vm211 = vcmp.ge.s32.totalorder %v208, 0
        %vm212 = vcmp.ge.s32.totalorder %v209, 0
        %vm213 = vcmp.lt.s32.totalorder %v207, 2
        %vm214 = vcmp.lt.s32.totalorder %v208, 2
        %vm215 = vcmp.lt.s32.totalorder %v209, 2
        %vm216 = vmand %vm210, %vm213
        %vm217 = vmand %vm211, %vm214
        %vm218 = vmand %vm212, %vm215
        %v219 = vsel %vm216, %v202, -inf
        %v220 = vsel %vm217, %v203, -inf
        %v221 = vsel %vm218, %v204, -inf
        %vm222 = vcmask 1045504
        %v223 = vsel %vm222, %v221, -inf
        %v224 = vmax.f32 %v219, %v220
        %v225 = vmax.f32 %v224, %v223
        %v226 = vrot.slane %v225, 4
        %v227 = vmax.f32 %v225, %v226
        %v228 = vrot.slane %v227, 2
        %v229 = vmax.f32 %v227, %v228
        %v230 = vrot.slane %v229, 1
        %v231 = vmax.f32 %v229, %v230
        %vm232 = vcmp.ge.s32.totalorder %v207, 2
        %vm233 = vcmp.ge.s32.totalorder %v208, 2
        %vm234 = vcmp.ge.s32.totalorder %v209, 2
        %vm235 = vcmp.lt.s32.totalorder %v207, 6
        %vm236 = vcmp.lt.s32.totalorder %v208, 6
        %vm237 = vcmp.lt.s32.totalorder %v209, 6
        %vm238 = vmand %vm232, %vm235
        %vm239 = vmand %vm233, %vm236
        %vm240 = vmand %vm234, %vm237
        %v241 = vsel %vm238, %v202, -inf
        %v242 = vsel %vm239, %v203, -inf
        %v243 = vsel %vm240, %v204, -inf
        %v244 = vsel %vm222, %v243, -inf
        %v245 = vmax.f32 %v241, %v242
        %v246 = vmax.f32 %v245, %v244
        %v247 = vrot.slane %v246, 4
        %v248 = vmax.f32 %v246, %v247
        %v249 = vrot.slane %v248, 2
        %v250 = vmax.f32 %v248, %v249
        %v251 = vrot.slane %v250, 1
        %v252 = vmax.f32 %v250, %v251
        %vm253 = vcmp.ge.s32.totalorder %v207, 6
        %vm254 = vcmp.ge.s32.totalorder %v208, 6
        %vm255 = vcmp.ge.s32.totalorder %v209, 6
        %vm256 = vcmp.lt.s32.totalorder %v207, 15
        %vm257 = vcmp.lt.s32.totalorder %v208, 15
        %vm258 = vcmp.lt.s32.totalorder %v209, 15
        %vm259 = vmand %vm253, %vm256
        %vm260 = vmand %vm254, %vm257
        %vm261 = vmand %vm255, %vm258
        %v262 = vsel %vm259, %v202, -inf
        %v263 = vsel %vm260, %v203, -inf
        %v264 = vsel %vm261, %v204, -inf
        %v265 = vsel %vm222, %v264, -inf
        %v266 = vmax.f32 %v262, %v263
        %v267 = vmax.f32 %v266, %v265
        %v268 = vrot.slane %v267, 4
        %v269 = vmax.f32 %v267, %v268
        %v270 = vrot.slane %v269, 2
        %v271 = vmax.f32 %v269, %v270
        %v272 = vrot.slane %v271, 1
        %v273 = vmax.f32 %v271, %v272
        %vm274 = vcmp.ge.s32.totalorder %v207, 15
        %vm275 = vcmp.ge.s32.totalorder %v208, 15
        %vm276 = vcmp.ge.s32.totalorder %v209, 15
        %vm277 = vcmp.lt.s32.totalorder %v207, 22
        %vm278 = vcmp.lt.s32.totalorder %v208, 22
        %vm279 = vcmp.lt.s32.totalorder %v209, 22
        %vm280 = vmand %vm274, %vm277
        %vm281 = vmand %vm275, %vm278
        %vm282 = vmand %vm276, %vm279
        %v283 = vsel %vm280, %v202, -inf
        %v284 = vsel %vm281, %v203, -inf
        %v285 = vsel %vm282, %v204, -inf
        %v286 = vsel %vm222, %v285, -inf
        %v287 = vmax.f32 %v283, %v284
        %v288 = vmax.f32 %v287, %v286
        %v289 = vrot.slane %v288, 4
        %v290 = vmax.f32 %v288, %v289
        %v291 = vrot.slane %v290, 2
        %v292 = vmax.f32 %v290, %v291
        %v293 = vrot.slane %v292, 1
        %v294 = vmax.f32 %v292, %v293
        %v295 = vsel %vm216, %v231, 0.0
        %v296 = vsel %vm217, %v231, 0.0
        %v297 = vsel %vm218, %v231, 0.0
        %v298 = vsel %vm238, %v252, %v295
        %v299 = vsel %vm239, %v252, %v296
        %v300 = vsel %vm240, %v252, %v297
        %v301 = vsel %vm259, %v273, %v298
        %v302 = vsel %vm260, %v273, %v299
        %v303 = vsel %vm261, %v273, %v300
        %v304 = vsel %vm280, %v294, %v301
        %v305 = vsel %vm281, %v294, %v302
        %v306 = vsel %vm282, %v294, %v303
        %v307 = vsub.f32 %v202, %v304
        %v308 = vsub.f32 %v203, %v305
        %v309 = vsub.f32 %v204, %v306
        %v310 = vmul.f32 %v307, 1.442695
        %v311 = vpow.pop %v310
        %v312 = vmul.f32 %v308, 1.442695
        %v313 = vpow.pop %v312
        %v314 = vmul.f32 %v309, 1.442695
        %v315 = vpow.pop %v314
        %v316 = vsel %vm216, %v311, 0.0
        %v317 = vsel %vm217, %v313, 0.0
        %v318 = vsel %vm218, %v315, 0.0
        %v319 = vadd.f32 %v316, %v317
        %v320 = vsel %vm222, %v318, 0.0
        %v321 = vadd.f32 %v319, %v320
        %v322 = vrot.slane %v321, 4
        %v323 = vadd.f32 %v321, %v322
        %v324 = vrot.slane %v323, 2
        %v325 = vadd.f32 %v323, %v324
        %v326 = vrot.slane %v325, 1
        %v327 = vadd.f32 %v325, %v326
        %v328 = vlog2.pop %v327
        %v329 = vmul.f32 %v328, 0.6931472
        %v330 = vadd.f32 %v231, %v329
        %v331 = vmul.f32 %v330, 0.1
        %v332 = vadd.f32 %v331, 0.0
        %v333 = vsel %vm238, %v311, 0.0
        %v334 = vsel %vm239, %v313, 0.0
        %v335 = vsel %vm240, %v315, 0.0
        %v336 = vadd.f32 %v333, %v334
        %v337 = vsel %vm222, %v335, 0.0
        %v338 = vadd.f32 %v336, %v337
        %v339 = vrot.slane %v338, 4
        %v340 = vadd.f32 %v338, %v339
        %v341 = vrot.slane %v340, 2
        %v342 = vadd.f32 %v340, %v341
        %v343 = vrot.slane %v342, 1
        %v344 = vadd.f32 %v342, %v343
        %v345 = vlog2.pop %v344
        %v346 = vmul.f32 %v345, 0.6931472
        %v347 = vadd.f32 %v252, %v346
        %v348 = vmul.f32 %v347, 0.1
        %v349 = vadd.f32 %v332, %v348
        %v350 = vsel %vm259, %v311, 0.0
        %v351 = vsel %vm260, %v313, 0.0
        %v352 = vsel %vm261, %v315, 0.0
        %v353 = vadd.f32 %v350, %v351
        %v354 = vsel %vm222, %v352, 0.0
        %v355 = vadd.f32 %v353, %v354
        %v356 = vrot.slane %v355, 4
        %v357 = vadd.f32 %v355, %v356
        %v358 = vrot.slane %v357, 2
        %v359 = vadd.f32 %v357, %v358
        %v360 = vrot.slane %v359, 1
        %v361 = vadd.f32 %v359, %v360
        %v362 = vlog2.pop %v361
        %v363 = vmul.f32 %v362, 0.6931472
        %v364 = vadd.f32 %v273, %v363
        %v365 = vmul.f32 %v364, 0.1
        %v366 = vadd.f32 %v349, %v365
        %v367 = vsel %vm280, %v311, 0.0
        %v368 = vsel %vm281, %v313, 0.0
        %v369 = vsel %vm282, %v315, 0.0
        %v370 = vadd.f32 %v367, %v368
        %v371 = vsel %vm222, %v369, 0.0
        %v372 = vadd.f32 %v370, %v371
        %v373 = vrot.slane %v372, 4
        %v374 = vadd.f32 %v372, %v373
        %v375 = vrot.slane %v374, 2
        %v376 = vadd.f32 %v374, %v375
        %v377 = vrot.slane %v376, 1
        %v378 = vadd.f32 %v376, %v377
        %v379 = vlog2.pop %v378
        %v380 = vmul.f32 %v379, 0.6931472
        %v381 = vadd.f32 %v294, %v380
        %v382 = vmul.f32 %v381, 0.7
        %v383 = vadd.f32 %v366, %v382
        %v384 = vperm.slane %v205, 0
        %vm385 = vcmp.eq.s32.totalorder %v207, %v384
        %vm386 = vcmp.eq.s32.totalorder %v208, %v384
        %vm387 = vcmp.eq.s32.totalorder %v209, %v384
        %v388 = vsel %vm385, 0.1, 0.0
        %v389 = vsel %vm386, 0.1, 0.0
        %v390 = vsel %vm387, 0.1, 0.0
        %v391 = vadd.s32 %v205, 2
        %v392 = vperm.slane %v391, 1
        %vm393 = vcmp.eq.s32.totalorder %v207, %v392
        %vm394 = vcmp.eq.s32.totalorder %v208, %v392
        %vm395 = vcmp.eq.s32.totalorder %v209, %v392
        %v396 = vsel %vm393, 0.1, %v388
        %v397 = vsel %vm394, 0.1, %v389
        %v398 = vsel %vm395, 0.1, %v390
        %v399 = vadd.s32 %v205, 6
        %v400 = vperm.slane %v399, 2
        %vm401 = vcmp.eq.s32.totalorder %v207, %v400
        %vm402 = vcmp.eq.s32.totalorder %v208, %v400
        %vm403 = vcmp.eq.s32.totalorder %v209, %v400
        %v404 = vsel %vm401, 0.1, %v396
        %v405 = vsel %vm402, 0.1, %v397
        %v406 = vsel %vm403, 0.1, %v398
        %v407 = vadd.s32 %v205, 15
        %v408 = vperm.slane %v407, 3
        %vm409 = vcmp.eq.s32.totalorder %v207, %v408
        %vm410 = vcmp.eq.s32.totalorder %v208, %v408
        %vm411 = vcmp.eq.s32.totalorder %v209, %v408
        %v412 = vsel %vm409, 0.7, %v404
        %v413 = vsel %vm410, 0.7, %v405
        %v414 = vsel %vm411, 0.7, %v406
        %v415 = vmul.f32 %v412, %v202
        %v416 = vmul.f32 %v413, %v203
        %v417 = vmul.f32 %v414, %v204
        %v418 = vadd.f32 %v415, %v416
        %v419 = vsel %vm222, %v417, 0.0
        %v420 = vadd.f32 %v418, %v419
        %v421 = vrot.slane %v420, 4
        %v422 = vadd.f32 %v420, %v421
        %v423 = vrot.slane %v422, 2
        %v424 = vadd.f32 %v422, %v423
        %v425 = vrot.slane %v424, 1
        %v426 = vadd.f32 %v424, %v425
        %v427 = vsub.f32 %v383, %v426
        %v428 = vlaneseq
        %v429 = vand.u32 %v428, 127
        %s430 = smul.u32 %s22, 128
        %v431 = vstv %s430
        %v432 = vadd.s32 %v429, %v431
        %vm433 = vcmp.lt.s32.totalorder %v432, 300
        %v434 = vsel %vm433, %v427, 0.0
        %vm435 = vcmask 1040384
        %v436 = vsel %vm435, %v434, 0.0
        %437 = vadd.xlane.f32.xlu0 %v436
        %v438 = vpop.xlane.xlu0 %437
        %v439 = vrot.slane %v438, 4
        %v440 = vadd.f32 %v438, %v439
        %v441 = vrot.slane %v440, 2
        %v442 = vadd.f32 %v440, %v441
        %v443 = vrot.slane %v442, 1
        %v444 = vadd.f32 %v442, %v443
        %s445 = vtos %v444
        %vm446 = vcmp.eq.s32.totalorder %v207, 0
        %vm447 = vcmp.eq.s32.totalorder %v429, 0
        %vm448 = vmand %vm446, %vm447
        %v449 = vstv %s445
        %v450 = vsel %vm448, %v449, 0.0
        %451 = vst [vmem:[%s201] sm:$0xff] %v450
        %s452 = sand.u32 %s82, 1
        %s453 = scalar_lea.sflag [#allocation4], %s452
        %s454 = sand.u32 %s82, 1
        %s455 = smul.addr %s454, 8
        %s456 = scalar_lea.vmem [#allocation7], %s455
        // Predicated region
        $region37: #{tpu_custom_call.1} parent=27 // pred_check
          %p457 = pneg %p92
        $region38: #{tpu_custom_call.1} parent=27 // pred_check_branch
          %459 = sbr.rel (%p457) target = $region40
        $region39: #{tpu_custom_call.1} parent=27 // pred_region
          %461 = vsyncadd %s453, 0
          %s462 = smul.addr %s22, 8
          %s463 = scalar_lea.hbm %s2, %s462
          %s465 = sshll.u32 %s456, 4
          %s466 = int_to_ptr.vmem [resolvable:$true] %s465
          %s467 = sshll.u32 %s463, 4
          %s468 = int_to_ptr.hbm [resolvable:$true] %s467
          %470 = dma.vmem_to_hbm [thread:$0]  %s466, 128, %s468, %s453
        $region40: #{tpu_custom_call.1} parent=27 // pred_fallthru
          _
      $region28: #{tpu_custom_call.1} parent=5 // pred_fallthru
        _
      %p471 = scmp.le.s32.totalorder 2, %s17
      // Predicated region
      $region41: #{tpu_custom_call.1} parent=5 // pred_check
        %p472 = pneg %p471
      $region42: #{tpu_custom_call.1} parent=5 // pred_check_branch
        %474 = sbr.rel (%p472) target = $region44
      $region43: #{tpu_custom_call.1} parent=5 // pred_region
        %s475 = ssub.s32 %s17, 2
        // Predicated region
        $region45: #{tpu_custom_call.1} parent=43 // pred_check
          %p476 = pneg %p98
        $region46: #{tpu_custom_call.1} parent=43 // pred_check_branch
          %478 = sbr.rel (%p476) target = $region48
        $region47: #{tpu_custom_call.1} parent=43 // pred_region
          %s479 = sand.u32 %s83, 1
          %s480 = scalar_lea.sflag [#allocation4], %s479
          %s481 = sand.u32 %s83, 1
          %s482 = smul.addr %s481, 8
          %s483 = scalar_lea.vmem [#allocation7], %s482
          %485 = dma.done %s480, 128
        $region48: #{tpu_custom_call.1} parent=43 // pred_fallthru
          _
      $region44: #{tpu_custom_call.1} parent=5 // pred_fallthru
        _
    $region6: #{tpu_custom_call.1} parent=1 // loop_footer
      %s21 = sadd.s32 1, %s17
    $region7: #{tpu_custom_call.1} parent=1 // loop_footer_branch
      %16 = sbr.rel target = $region3
    $region8: #{tpu_custom_call.1} parent=1 // loop_exit
      _
    %486 = vsyncpa [#allocation3], 1
    %s487 = scalar_lea.sflag [#allocation3], 1
    %488 = vsyncpa %s487, 1
    %489 = vsyncpa [#allocation6], 1
    %s490 = scalar_lea.sflag [#allocation6], 1
    %491 = vsyncpa %s490, 1
    %492 = vsyncpa [#allocation4], 1
    %s493 = scalar_lea.sflag [#allocation4], 1
    %494 = vsyncpa %s493, 1

</llo_original>
